<compile_context>
chip_gen: v7x
topology: tpu7x:2x2x1
jax: 0.10.0
libtpu: 0.0.40
codegen_flags: <defaults>
</compile_context>

<pallas_src>
import functools

import jax
import jax.numpy as jnp
from jax.experimental import pallas as pl
from jax.experimental.pallas import tpu as pltpu


# ----------------------------------------------------------------------------------
# Roll-direction probe: resolve the hardware lane-rotate convention once so the
# static conv-tap shifts are provably correct regardless of pltpu.roll's sign.
# ----------------------------------------------------------------------------------
@functools.lru_cache(maxsize=None)
def _roll_matches_jnp_roll():
    """True iff pltpu.roll(x, s)[n] == x[(n - s) % N] (jnp.roll convention)."""
    def k(x_ref, o_ref):
        o_ref[...] = pltpu.roll(x_ref[...], 1, axis=1)

    x = jax.lax.broadcasted_iota(jnp.float32, (8, 128), 1)
    y = pl.pallas_call(k, out_shape=jax.ShapeDtypeStruct((8, 128), jnp.float32))(x)
    return bool(y[0, 0] == jnp.float32(127.0))


# ----------------------------------------------------------------------------------
# Fused Pallas kernel: mask * k-space -> centered 2-D ortho IDFT -> 2-layer 3x3 CNN
# (channel-major, conv taps via lane rolls + boundary masks, one matmul per conv)
# -> [2, HW] (real / imag rows) lane-dense output.  One grid step per batch element.
# ----------------------------------------------------------------------------------
def _fused_kernel(km_ref, mask_ref, gre_ref, gim_ref, tapm_ref,
                  w1_ref, b1_ref, w2_ref, b2_ref,
                  o_ref,
                  p1_ref, p2_ref, *, C, HID, HW, TAPS, shifts):
    f32 = jnp.float32
    C2 = 2 * C

    # ---- k-space masking (VPU, f32; exact since mask is 0/1) -------------------
    km = km_ref[0] * mask_ref[0]                          # [2C, HW] * [1, HW]

    # ---- centered 2-D ortho IDFT: two matmuls + VPU recombine -------------------
    # km rows are [Re(K) (C rows); Im(K) (C rows)].
    p = jnp.dot(km, gre_ref[...], preferred_element_type=f32)   # [2C, HW]
    q = jnp.dot(km, gim_ref[...], preferred_element_type=f32)   # [2C, HW]
    #   x_re = Re@Gre - Im@Gim = p[:C] - q[C:]
    #   x_im = Re@Gim + Im@Gre = q[:C] + p[C:]
    # feat = [x_re; x_im] = p + sign * roll(q, C, axis=0)
    # (rolling 2C rows by C is the same permutation in either direction).
    q_swap = pltpu.roll(q, C, axis=0)
    row = jax.lax.broadcasted_iota(jnp.int32, (C2, HW), 0)
    sign = jnp.where(row < C, jnp.float32(-1.0), jnp.float32(1.0))
    feat = p + sign * q_swap                              # [2C, HW] f32

    def shifted(x, t):
        # x shifted so that column n holds x[:, n + offset_t], zero-padded at the
        # image border (cyclic wrap is killed by the 0/1 boundary mask).
        if shifts[t] == 0:
            return x                                      # centre tap: identity
        return pltpu.roll(x, shifts[t], axis=1) * tapm_ref[t]

    # ---- conv1: stage 9 shifted copies, one [HID, 9*2C] @ [9*2C, HW] matmul ----
    for t in range(TAPS):
        p1_ref[t * C2:(t + 1) * C2, :] = shifted(feat, t)
    h = jnp.dot(w1_ref[...], p1_ref[...], preferred_element_type=f32) + b1_ref[...]
    h = jnp.maximum(h, 0.0)                               # [HID, HW]

    # ---- conv2: stage 9 shifted copies, one [2, 9*HID] @ [9*HID, HW] matmul ----
    for t in range(TAPS):
        p2_ref[t * HID:(t + 1) * HID, :] = shifted(h, t)
    y = jnp.dot(w2_ref[...], p2_ref[...], preferred_element_type=f32) + b2_ref[...]

    o_ref[0] = y                                          # [2, HW]; row0=re, row1=im


def _fused_forward(km, mask, gre, gim, tap_masks, w1f, b1b, w2f, b2b, shifts):
    """km: [B, 2C, HW] f32; mask: [B, 1, HW]; gre/gim: [HW, HW] f32;
    tap_masks: [9, 1, HW] f32; w1f: [HID, 9*2C]; b1b: [HID, HW];
    w2f: [2, 9*HID]; b2b: [2, HW]; shifts: static tuple of 9 lane shifts."""
    B, C2, HW = km.shape
    C = C2 // 2
    HID = w1f.shape[0]
    TAPS = len(shifts)

    flops_per_batch = (2 * (2 * C2 * HW * HW)            # IDFT (2 matmuls)
                       + 2 * HID * (TAPS * C2) * HW      # conv1
                       + 2 * 2 * (TAPS * HID) * HW)      # conv2
    args = (km, mask, gre, gim, tap_masks, w1f, b1b, w2f, b2b)
    bytes_accessed = int(sum(a.size * a.dtype.itemsize for a in args)
                         + B * 2 * HW * 4)

    kernel = functools.partial(_fused_kernel, C=C, HID=HID, HW=HW, TAPS=TAPS,
                               shifts=shifts)
    return pl.pallas_call(
        kernel,
        out_shape=jax.ShapeDtypeStruct((B, 2, HW), jnp.float32),
        grid=(B,),
        in_specs=[
            pl.BlockSpec((1, C2, HW), lambda b: (b, 0, 0)),        # k-space (re|im)
            pl.BlockSpec((1, 1, HW), lambda b: (b, 0, 0)),         # sampling mask
            # Grid-invariant operands below (constant index_map -> fetched once per
            # core).  At larger HW also mark them pipeline_mode=pl.Buffered(1).
            pl.BlockSpec((HW, HW), lambda b: (0, 0)),              # G^T real (f32)
            pl.BlockSpec((HW, HW), lambda b: (0, 0)),              # G^T imag (f32)
            pl.BlockSpec((TAPS, 1, HW), lambda b: (0, 0, 0)),      # conv boundary masks
            pl.BlockSpec((HID, TAPS * C2), lambda b: (0, 0)),      # conv1 weights
            pl.BlockSpec((HID, HW), lambda b: (0, 0)),             # conv1 bias (lane-dense)
            pl.BlockSpec((2, TAPS * HID), lambda b: (0, 0)),       # conv2 weights
            pl.BlockSpec((2, HW), lambda b: (0, 0)),               # conv2 bias (lane-dense)
        ],
        out_specs=pl.BlockSpec((1, 2, HW), lambda b: (b, 0, 0)),   # lane-dense store
        scratch_shapes=[pltpu.VMEM((TAPS * C2, HW), jnp.float32),  # conv1 patches
                        pltpu.VMEM((TAPS * HID, HW), jnp.float32)],  # conv2 patches
        compiler_params=pltpu.CompilerParams(dimension_semantics=("parallel",)),
        cost_estimate=pl.CostEstimate(flops=int(B * flops_per_batch),
                                      transcendentals=0,
                                      bytes_accessed=bytes_accessed),
    )(*args)


# ----------------------------------------------------------------------------------
# Constant operators (computed in the wrapper; tiny at these sizes, constant-folded).
# ----------------------------------------------------------------------------------
def _centered_idft_matrix(n):
    """Matrix M with M @ v == fftshift(ifft(ifftshift(v), norm='ortho'))."""
    eye = jnp.eye(n, dtype=jnp.complex64)
    m = jnp.fft.ifftshift(eye, axes=0)
    m = jnp.fft.ifft(m, axis=0, norm="ortho")
    m = jnp.fft.fftshift(m, axes=0)
    return m


def _kron_idft_operator(h, w):
    """G^T (real, imag) in f32, with vec_r(Mh @ K @ Mw^T) == G @ vec_r(K).
    Kept f32 (not bf16) to preserve k-space dynamic range."""
    g = jnp.kron(_centered_idft_matrix(h), _centered_idft_matrix(w))   # [HW, HW]
    gt = jnp.transpose(g)                                              # no conj
    return jnp.real(gt).astype(jnp.float32), jnp.imag(gt).astype(jnp.float32)


def _tap_offsets_and_masks(h, w):
    """Static flat-lane offsets and 0/1 validity masks for the 9 taps of a 3x3
    'same' conv on a row-major-flattened [H*W] image."""
    hw = h * w
    n = jnp.arange(hw)
    i, j = n // w, n % w
    offsets, masks = [], []
    for dy in (-1, 0, 1):
        for dx in (-1, 0, 1):
            offsets.append(dy * w + dx)                   # static Python int
            valid = (i + dy >= 0) & (i + dy < h) & (j + dx >= 0) & (j + dx < w)
            masks.append(valid.astype(jnp.float32))
    return tuple(offsets), jnp.stack(masks, axis=0).reshape(len(offsets), 1, hw)


def _prep_net_params(params, C, HW):
    """HWIO conv weights -> fused per-tap channel-major blocks; biases lane-dense."""
    w1 = params["w1"]                     # [3, 3, 2C, HID]
    w2 = params["w2"]                     # [3, 3, HID, 2]
    HID = w1.shape[-1]
    # column index = tap * Cin + cin, matching the patch-scratch row order.
    w1f = jnp.transpose(w1, (3, 0, 1, 2)).reshape(HID, 9 * 2 * C).astype(jnp.float32)
    w2f = jnp.transpose(w2, (3, 0, 1, 2)).reshape(2, 9 * HID).astype(jnp.float32)
    b1b = jnp.broadcast_to(params["b1"].reshape(HID, 1), (HID, HW)).astype(jnp.float32)
    b2b = jnp.broadcast_to(params["b2"].reshape(2, 1), (2, HW)).astype(jnp.float32)
    return w1f, b1b, w2f, b2b


def init_params(key, in_ch, hidden, out_ch=2):
    kw1, kw2 = jax.random.split(key)
    return {
        "w1": (0.1 * jax.random.normal(kw1, (3, 3, in_ch, hidden))).astype(jnp.float32),
        "b1": jnp.full((1, hidden), 0.01, jnp.float32),
        "w2": (0.1 * jax.random.normal(kw2, (3, 3, hidden, out_ch))).astype(jnp.float32),
        "b2": jnp.full((1, out_ch), 0.01, jnp.float32),
    }


# ----------------------------------------------------------------------------------
# Forward (single fused pallas_call + free layout plumbing).
# ----------------------------------------------------------------------------------
def mc_dcfree_forward(inputs, params):
    random_sample_img, sensemap, random_sample_mask, full_sampling_kspace = inputs
    del random_sample_img, sensemap       # unused in the reference forward as well

    B, C, H, W = full_sampling_kspace.shape
    HW = H * W
    kre = jnp.real(full_sampling_kspace).astype(jnp.float32)
    kim = jnp.imag(full_sampling_kspace).astype(jnp.float32)
    km = jnp.concatenate([kre, kim], axis=1).reshape(B, 2 * C, HW)     # [B, 2C, HW]
    mask = random_sample_mask.astype(jnp.float32).reshape(B, 1, HW)

    gt_re, gt_im = _kron_idft_operator(H, W)
    offsets, tap_masks = _tap_offsets_and_masks(H, W)
    # Static lane shifts such that rolled[:, n] == x[:, (n + offset) mod HW],
    # robust to either hardware rotate convention.
    if _roll_matches_jnp_roll():
        shifts = tuple((-o) % HW for o in offsets)
    else:
        shifts = tuple(o % HW for o in offsets)
    w1f, b1b, w2f, b2b = _prep_net_params(params, C, HW)

    out2 = _fused_forward(km, mask, gt_re, gt_im, tap_masks,
                          w1f, b1b, w2f, b2b, shifts)                  # [B, 2, HW]
    out = (out2[:, 0, :] + 1j * out2[:, 1, :]).astype(jnp.complex64)
    return out.reshape(B, H, W)


# ----------------------------------------------------------------------------------
# Pure-JAX reference for validation (jnp.fft + lax.conv, float32).
# ----------------------------------------------------------------------------------
def _reference_forward(inputs, params):
    _, _, mask, kspace = inputs
    m = mask[:, None, :, :].astype(kspace.dtype)
    x = jnp.fft.ifftshift(kspace * m, axes=(-2, -1))
    x = jnp.fft.ifft2(x, axes=(-2, -1), norm="ortho")
    x = jnp.fft.fftshift(x, axes=(-2, -1))
    feat = jnp.concatenate([jnp.real(x), jnp.imag(x)], axis=1).astype(jnp.float32)
    dn = ("NCHW", "HWIO", "NCHW")
    h = jax.lax.conv_general_dilated(feat, params["w1"], (1, 1), "SAME",
                                     dimension_numbers=dn)
    h = jnp.maximum(h + params["b1"].reshape(1, -1, 1, 1), 0.0)
    y = jax.lax.conv_general_dilated(h, params["w2"], (1, 1), "SAME",
                                     dimension_numbers=dn)
    y = y + params["b2"].reshape(1, -1, 1, 1)
    return (y[:, 0] + 1j * y[:, 1]).astype(jnp.complex64)


if __name__ == "__main__":
    B, C, H, W = 2, 4, 16, 16
    HIDDEN = 16

    key = jax.random.PRNGKey(0)
    k1, k2, k3, k4, k5, k6, k7, k8 = jax.random.split(key, 8)

    full_sampling_kspace = (jax.random.normal(k1, (B, C, H, W))
                            + 1j * jax.random.normal(k2, (B, C, H, W))).astype(jnp.complex64)
    random_sample_mask = jax.random.bernoulli(k3, 0.5, (B, H, W)).astype(jnp.float32)
    random_sample_img = (jax.random.normal(k4, (B, H, W))
                         + 1j * jax.random.normal(k5, (B, H, W))).astype(jnp.complex64)
    sensemap = (jax.random.normal(k6, (B, C, H, W))
                + 1j * jax.random.normal(k7, (B, C, H, W))).astype(jnp.complex64)

    params = init_params(k8, in_ch=2 * C, hidden=HIDDEN)
    inputs = (random_sample_img, sensemap, random_sample_mask, full_sampling_kspace)

    # Resolve the hardware lane-rotate direction once, outside the jit trace.
    _roll_matches_jnp_roll()

    fwd = jax.jit(mc_dcfree_forward)
    out = jax.block_until_ready(fwd(inputs, params))
    assert out.shape == (B, H, W) and out.dtype == jnp.complex64

    # End-to-end check (validates the Kronecker IDFT, roll-based conv taps and
    # weight fusion).  Loose tolerance to absorb MXU matmul precision.
    ref = _reference_forward(inputs, params)
    max_err = float(jnp.max(jnp.abs(out - ref)))
    scale = float(jnp.max(jnp.abs(ref)))
    assert max_err <= 5e-2 * max(scale, 1.0), f"mismatch: {max_err} (scale {scale})"

    print("KERNEL_OK")
</pallas_src>

<mosaic_0001>
module attributes {stable_mosaic.version = 11 : i64} {
  func.func @k(%arg0: memref<8x128xf32, #tpu.memory_space<vmem>>, %arg1: memref<8x128xf32, #tpu.memory_space<vmem>>) attributes {dimension_semantics = [], scalar_prefetch = 0 : i64, scratch_operands = 0 : i64, tpu.core_type = #tpu.core_type<tc>} {
    %c0 = arith.constant 0 : index
    %c0_0 = arith.constant 0 : index
    %0 = vector.load %arg0[%c0, %c0_0] : memref<8x128xf32, #tpu.memory_space<vmem>>, vector<8x128xf32>
    %c1_i32 = arith.constant 1 : i32
    %1 = tpu.dynamic_rotate %0 by %c1_i32 dim 1 : vector<8x128xf32>, i32 -> vector<8x128xf32>
    %c0_1 = arith.constant 0 : index
    %c0_2 = arith.constant 0 : index
    %2 = vector.load %arg1[%c0_1, %c0_2] : memref<8x128xf32, #tpu.memory_space<vmem>>, vector<8x128xf32>
    tpu.vector_store %arg1[%c0_1, %c0_2], %1 {strides = array<i32>} : memref<8x128xf32, #tpu.memory_space<vmem>>, vector<8x128xf32>,
    return
  }
}

</mosaic_0001>

<llo_original>
// kernel: tpu_custom_call.1
$region0: #{tpu_custom_call.1}
  #allocation0 [shape = 'u32[]', space=smem, size = 0x4, offset = 0x4, fixed_abs, tag = 'smem constant byte address 0x4 - core index']
  #allocation1 [shape = 'u32[144,128]{1,0:T(1,128)}', space=vmem, size = 0x12000, scoped, tag = 'internal scratch']
  %s0 = inlined_call_operand.hbm [shape: f32[8,128], index: 0, kind: input, shape index: {}]
  %s1 = inlined_call_operand.hbm [shape: f32[8,128], index: 1, kind: output, shape index: {}]
  %s2 = sld [smem:[#allocation0]]
  $region18: #{tpu_custom_call.1} parent=0
    _
  %s4 = ssub.s32 1, %s2
  %s5 = scalar_select 0, %s4, %s2
  $region1: #{tpu_custom_call.1} parent=0
    #allocation2 [shape = 'u8[4096]{0}', space=vmem, size = 0x1000, scoped, tag = 'input window, operand 0, single buffered']
    #allocation3 [shape = 's32[1]{0}', space=sflag, size = 0x4, scoped, tag = 'scoped memory for tpu_custom_call.1']
    #allocation4 [shape = 's32[1]{0}', space=sflag, size = 0x4, scoped, tag = 'scoped memory for tpu_custom_call.1']
    #allocation5 [shape = 'u8[4096]{0}', space=vmem, size = 0x1000, scoped, tag = 'output window, operand 0, single buffered']
    %6 = vsyncpa [#allocation3], 0
    %7 = vsyncpa [#allocation4], 0
    // Predicated region
    $region2: #{tpu_custom_call.1} parent=1 // pred_check
      _
    $region3: #{tpu_custom_call.1} parent=1 // pred_check_branch
      %9 = sbr.rel (0) target = $region5
    $region4: #{tpu_custom_call.1} parent=1 // pred_region
      %s11 = ssub.s32 128, 128
      %12 = vsyncadd [#allocation3], %s11
      %s14 = sshll.u32 [#allocation2], 4
      %s15 = int_to_ptr.vmem [resolvable:$true] %s14
      %17 = dma.hbm_to_vmem [thread:$0]  %s0, 128, %s15, [#allocation3]
    $region5: #{tpu_custom_call.1} parent=1 // pred_fallthru
      _
    // Predicated region
    $region6: #{tpu_custom_call.1} parent=1 // pred_check
      _
    $region7: #{tpu_custom_call.1} parent=1 // pred_check_branch
      %19 = sbr.rel (0) target = $region9
    $region8: #{tpu_custom_call.1} parent=1 // pred_region
      %20 = dma.done [#allocation3], 128
    $region9: #{tpu_custom_call.1} parent=1 // pred_fallthru
      _
    %v21 = vld [vmem:[#allocation2] sm:$0xff]
    %22 = vrot.lane.b32.xlu0 %v21, 1
    %v23 = vpop.permute.xlu0 %22
    %24 = vst [vmem:[#allocation5] sm:$0xff] %v23
    // Predicated region
    $region10: #{tpu_custom_call.1} parent=1 // pred_check
      _
    $region11: #{tpu_custom_call.1} parent=1 // pred_check_branch
      %26 = sbr.rel (0) target = $region13
    $region12: #{tpu_custom_call.1} parent=1 // pred_region
      %s28 = ssub.s32 128, 128
      %29 = vsyncadd [#allocation4], %s28
      %s31 = sshll.u32 [#allocation5], 4
      %s32 = int_to_ptr.vmem [resolvable:$true] %s31
      %34 = dma.vmem_to_hbm [thread:$0]  %s32, 128, %s1, [#allocation4]
    $region13: #{tpu_custom_call.1} parent=1 // pred_fallthru
      _
    // Predicated region
    $region14: #{tpu_custom_call.1} parent=1 // pred_check
      _
    $region15: #{tpu_custom_call.1} parent=1 // pred_check_branch
      %36 = sbr.rel (0) target = $region17
    $region16: #{tpu_custom_call.1} parent=1 // pred_region
      %37 = dma.done [#allocation4], 128
    $region17: #{tpu_custom_call.1} parent=1 // pred_fallthru
      _
    %38 = vsyncpa [#allocation3], 1
    %39 = vsyncpa [#allocation4], 1

</llo_original>
